<compile_context>
chip_gen: v5e
topology: v5e:2x2
jax: 0.10.0
libtpu: 0.0.40
codegen_flags: <defaults>
</compile_context>

<pallas_src>
import functools

import jax
import jax.numpy as jnp
from jax.experimental import pallas as pl
from jax.experimental.pallas import tpu as pltpu

INPUT_DIM = 7
HIDDEN_DIM = 64
OUTPUT_DIM = 128

# Per batch row, double-buffered, lane-padded:
#   x block: 128 lanes * 4 B * 2 bufs = 1 KiB ; out block: 128 * 4 * 2 = 1 KiB
# => ~2 KiB/row. DEFAULT_BLOCK_B=4096 -> ~8 MiB; MAX_BLOCK_B=8192 -> ~16 MiB,
# comfortably under the 32 MiB scoped-VMEM limit we request below on all gens.
DEFAULT_BLOCK_B = 4096
MAX_BLOCK_B = 8192
VMEM_LIMIT_BYTES = 32 * 1024 * 1024


def _round_up(n, m):
    return ((n + m - 1) // m) * m


def pose_encoder_kernel(x_ref, w1_ref, b1_ref, w2_ref, b2_ref, o_ref, *, bf16_matmul):
    # x:  [TB, 7]    w1: [7, 64]   b1: [1, 64]
    # w2: [64, 128]  b2: [1, 128]  o:  [TB, 128]
    x = x_ref[...]
    w1 = w1_ref[...]
    w2 = w2_ref[...]
    if bf16_matmul:
        x = x.astype(jnp.bfloat16)
        w1 = w1.astype(jnp.bfloat16)
        w2 = w2.astype(jnp.bfloat16)
    h = jnp.dot(x, w1, preferred_element_type=jnp.float32) + b1_ref[...]
    h = jnp.maximum(h, 0.0)  # ReLU (VPU)
    if bf16_matmul:
        h = h.astype(jnp.bfloat16)
    y = jnp.dot(h, w2, preferred_element_type=jnp.float32) + b2_ref[...]
    o_ref[...] = y.astype(o_ref.dtype)


def pose_encoder(x, w1, b1, w2, b2, *, block_b=DEFAULT_BLOCK_B, bf16_matmul=False,
                 out_dtype=jnp.float32):
    """x: [B, INPUT_DIM] float32 -> [B, OUTPUT_DIM] (out_dtype, default float32)."""
    B = x.shape[0]

    # Batch tile: ~half the batch (so the grid has >=2 steps for dual-TC v7x),
    # sublane-aligned, capped by the requested tile and the VMEM budget.
    tb = _round_up(max(-(-B // 2), 1), 8)
    tb = min(tb, block_b, MAX_BLOCK_B)
    grid = (pl.cdiv(B, tb),)

    cost = pl.CostEstimate(
        flops=2 * B * (INPUT_DIM * HIDDEN_DIM + HIDDEN_DIM * OUTPUT_DIM),
        transcendentals=0,
        bytes_accessed=4 * (B * (INPUT_DIM + OUTPUT_DIM)
                            + INPUT_DIM * HIDDEN_DIM + HIDDEN_DIM
                            + HIDDEN_DIM * OUTPUT_DIM + OUTPUT_DIM),
    )

    kernel = functools.partial(pose_encoder_kernel, bf16_matmul=bf16_matmul)
    return pl.pallas_call(
        kernel,
        out_shape=jax.ShapeDtypeStruct((B, OUTPUT_DIM), out_dtype),
        grid=grid,
        in_specs=[
            pl.BlockSpec((tb, INPUT_DIM), lambda i: (i, 0)),            # x tile
            pl.BlockSpec((INPUT_DIM, HIDDEN_DIM), lambda i: (0, 0)),    # w1 (resident)
            pl.BlockSpec((1, HIDDEN_DIM), lambda i: (0, 0)),            # b1 (resident)
            pl.BlockSpec((HIDDEN_DIM, OUTPUT_DIM), lambda i: (0, 0)),   # w2 (resident)
            pl.BlockSpec((1, OUTPUT_DIM), lambda i: (0, 0)),            # b2 (resident)
        ],
        out_specs=pl.BlockSpec((tb, OUTPUT_DIM), lambda i: (i, 0)),
        compiler_params=pltpu.CompilerParams(
            dimension_semantics=("parallel",),
            vmem_limit_bytes=VMEM_LIMIT_BYTES,
        ),
        cost_estimate=cost,
    )(x, w1, b1, w2, b2)


def init_params(key):
    """Deterministic init mimicking nn.Linear defaults (uniform +/- 1/sqrt(fan_in))."""
    k1, k2, k3, k4 = jax.random.split(key, 4)
    lim1 = 1.0 / jnp.sqrt(INPUT_DIM)
    lim2 = 1.0 / jnp.sqrt(HIDDEN_DIM)
    w1 = jax.random.uniform(k1, (INPUT_DIM, HIDDEN_DIM), jnp.float32, -lim1, lim1)
    b1 = jax.random.uniform(k2, (1, HIDDEN_DIM), jnp.float32, -lim1, lim1)
    w2 = jax.random.uniform(k3, (HIDDEN_DIM, OUTPUT_DIM), jnp.float32, -lim2, lim2)
    b2 = jax.random.uniform(k4, (1, OUTPUT_DIM), jnp.float32, -lim2, lim2)
    return w1, b1, w2, b2


def pose_encoder_ref(x, w1, b1, w2, b2):
    h = jnp.maximum(x @ w1 + b1, 0.0)
    return h @ w2 + b2


if __name__ == "__main__":
    key = jax.random.PRNGKey(0)
    kx, kp, kx2, kx3 = jax.random.split(key, 4)
    w1, b1, w2, b2 = init_params(kp)

    # Small batch (single grid step).
    B = 8
    x = jax.random.normal(kx, (B, INPUT_DIM), jnp.float32)
    out = jax.block_until_ready(pose_encoder(x, w1, b1, w2, b2))
    ref = pose_encoder_ref(x, w1, b1, w2, b2)
    assert out.shape == (B, OUTPUT_DIM), out.shape
    assert jnp.allclose(out, ref, atol=1e-5, rtol=1e-5), "mismatch vs reference (B=8)"

    # Larger batch that exercises the multi-step grid AND the masked partial
    # last block (no wrapper padding, no output slice).
    B2 = 1000
    x2 = jax.random.normal(kx2, (B2, INPUT_DIM), jnp.float32)
    out2 = jax.block_until_ready(pose_encoder(x2, w1, b1, w2, b2))
    ref2 = pose_encoder_ref(x2, w1, b1, w2, b2)
    assert out2.shape == (B2, OUTPUT_DIM), out2.shape
    assert jnp.allclose(out2, ref2, atol=1e-5, rtol=1e-5), "mismatch vs reference (B=1000)"

    # bf16-MXU path (v5e-friendly); f32 accumulation, looser tolerance.
    B3 = 64
    x3 = jax.random.normal(kx3, (B3, INPUT_DIM), jnp.float32)
    out3 = jax.block_until_ready(pose_encoder(x3, w1, b1, w2, b2, bf16_matmul=True))
    ref3 = pose_encoder_ref(x3, w1, b1, w2, b2)
    assert out3.shape == (B3, OUTPUT_DIM), out3.shape
    assert jnp.allclose(out3, ref3, atol=5e-2, rtol=5e-2), "mismatch vs reference (bf16)"

    print("KERNEL_OK")
</pallas_src>

<mosaic_0001>
module attributes {stable_mosaic.version = 11 : i64} {
  func.func @pose_encoder_kernel(%arg0: i32, %arg1: memref<8x7xf32, #tpu.memory_space<vmem>>, %arg2: memref<7x64xf32, #tpu.memory_space<vmem>>, %arg3: memref<1x64xf32, #tpu.memory_space<vmem>>, %arg4: memref<64x128xf32, #tpu.memory_space<vmem>>, %arg5: memref<1x128xf32, #tpu.memory_space<vmem>>, %arg6: memref<8x128xf32, #tpu.memory_space<vmem>>) attributes {dimension_semantics = [#tpu.dimension_semantics<parallel>], iteration_bounds = array<i64: 1>, scalar_prefetch = 0 : i64, scratch_operands = 0 : i64, tpu.core_type = #tpu.core_type<tc>, window_params = [{transform_indices = @transform_0, window_bounds = array<i64: 8, 7>}, {pipeline_mode = #tpu.pipeline_mode<synchronous>, transform_indices = @transform_1, window_bounds = array<i64: 7, 64>}, {pipeline_mode = #tpu.pipeline_mode<synchronous>, transform_indices = @transform_2, window_bounds = array<i64: 1, 64>}, {pipeline_mode = #tpu.pipeline_mode<synchronous>, transform_indices = @transform_3, window_bounds = array<i64: 64, 128>}, {pipeline_mode = #tpu.pipeline_mode<synchronous>, transform_indices = @transform_4, window_bounds = array<i64: 1, 128>}, {transform_indices = @transform_5, window_bounds = array<i64: 8, 128>}]} {
    %c0 = arith.constant 0 : index
    %c0_0 = arith.constant 0 : index
    %0 = vector.load %arg1[%c0, %c0_0] : memref<8x7xf32, #tpu.memory_space<vmem>>, vector<8x7xf32>
    %c0_1 = arith.constant 0 : index
    %c0_2 = arith.constant 0 : index
    %1 = vector.load %arg2[%c0_1, %c0_2] : memref<7x64xf32, #tpu.memory_space<vmem>>, vector<7x64xf32>
    %c0_3 = arith.constant 0 : index
    %c0_4 = arith.constant 0 : index
    %2 = vector.load %arg4[%c0_3, %c0_4] : memref<64x128xf32, #tpu.memory_space<vmem>>, vector<64x128xf32>
    %cst = arith.constant dense<0.000000e+00> : vector<8x64xf32>
    %3 = tpu.matmul %0, %1, %cst {dimension_numbers = #tpu.dot_dimension_numbers<[1], [0], [0], [1], [0, 0, 1, 1], [], []>} : vector<8x7xf32>, vector<7x64xf32>, vector<8x64xf32> -> vector<8x64xf32>
    %c0_5 = arith.constant 0 : index
    %c0_6 = arith.constant 0 : index
    %4 = vector.load %arg3[%c0_5, %c0_6] : memref<1x64xf32, #tpu.memory_space<vmem>>, vector<1x64xf32>
    %5 = vector.broadcast %4 : vector<1x64xf32> to vector<8x64xf32>
    %6 = arith.addf %3, %5 : vector<8x64xf32>
    %cst_7 = arith.constant 0.000000e+00 : f32
    %7 = vector.broadcast %cst_7 : f32 to vector<8x64xf32>
    %8 = arith.maximumf %6, %7 : vector<8x64xf32>
    %cst_8 = arith.constant dense<0.000000e+00> : vector<8x128xf32>
    %9 = tpu.matmul %8, %2, %cst_8 {dimension_numbers = #tpu.dot_dimension_numbers<[1], [0], [0], [1], [0, 0, 1, 1], [], []>} : vector<8x64xf32>, vector<64x128xf32>, vector<8x128xf32> -> vector<8x128xf32>
    %c0_9 = arith.constant 0 : index
    %c0_10 = arith.constant 0 : index
    %10 = vector.load %arg5[%c0_9, %c0_10] : memref<1x128xf32, #tpu.memory_space<vmem>>, vector<1x128xf32>
    %11 = vector.broadcast %10 : vector<1x128xf32> to vector<8x128xf32>
    %12 = arith.addf %9, %11 : vector<8x128xf32>
    %c0_11 = arith.constant 0 : index
    %c0_12 = arith.constant 0 : index
    %13 = vector.load %arg6[%c0_11, %c0_12] : memref<8x128xf32, #tpu.memory_space<vmem>>, vector<8x128xf32>
    tpu.vector_store %arg6[%c0_11, %c0_12], %12 {strides = array<i32>} : memref<8x128xf32, #tpu.memory_space<vmem>>, vector<8x128xf32>,
    return
  }
  func.func @transform_0(%arg0: i32) -> (i32, i32) {
    %c0_i32 = arith.constant 0 : i32
    %c0_i32_0 = arith.constant 0 : i32
    return %arg0, %c0_i32 : i32, i32
  }
  func.func @transform_1(%arg0: i32) -> (i32, i32) {
    %c0_i32 = arith.constant 0 : i32
    %c0_i32_0 = arith.constant 0 : i32
    %c0_i32_1 = arith.constant 0 : i32
    return %c0_i32, %c0_i32_0 : i32, i32
  }
  func.func @transform_2(%arg0: i32) -> (i32, i32) {
    %c0_i32 = arith.constant 0 : i32
    %c0_i32_0 = arith.constant 0 : i32
    %c0_i32_1 = arith.constant 0 : i32
    return %c0_i32, %c0_i32_0 : i32, i32
  }
  func.func @transform_3(%arg0: i32) -> (i32, i32) {
    %c0_i32 = arith.constant 0 : i32
    %c0_i32_0 = arith.constant 0 : i32
    %c0_i32_1 = arith.constant 0 : i32
    return %c0_i32, %c0_i32_0 : i32, i32
  }
  func.func @transform_4(%arg0: i32) -> (i32, i32) {
    %c0_i32 = arith.constant 0 : i32
    %c0_i32_0 = arith.constant 0 : i32
    %c0_i32_1 = arith.constant 0 : i32
    return %c0_i32, %c0_i32_0 : i32, i32
  }
  func.func @transform_5(%arg0: i32) -> (i32, i32) {
    %c0_i32 = arith.constant 0 : i32
    %c0_i32_0 = arith.constant 0 : i32
    return %arg0, %c0_i32 : i32, i32
  }
}

</mosaic_0001>

<llo_original>
// kernel: tpu_custom_call.1
$region0: #{tpu_custom_call.1}
  #allocation0 [shape = 'u32[]', space=smem, size = 0x4, offset = 0x4, fixed_abs, tag = 'smem constant byte address 0x4 - core index']
  #allocation1 [shape = 'u32[72,128]{1,0:T(1,128)}', space=vmem, size = 0x9000, scoped, tag = 'internal scratch']
  %s0 = inlined_call_operand.hbm [shape: f32[8,7], index: 0, kind: input, shape index: {}]
  %s1 = inlined_call_operand.hbm [shape: f32[7,64], index: 1, kind: input, shape index: {}]
  %s2 = inlined_call_operand.vmem [shape: f32[1,64], index: 2, kind: input, shape index: {}]
  %s3 = inlined_call_operand.hbm [shape: f32[64,128], index: 3, kind: input, shape index: {}]
  %s4 = inlined_call_operand.vmem [shape: f32[1,128], index: 4, kind: input, shape index: {}]
  %s5 = inlined_call_operand.hbm [shape: f32[8,128], index: 5, kind: output, shape index: {}]
  %s6 = sld [smem:[#allocation0]]
  $region42: #{tpu_custom_call.1} parent=0
    _
  %s8 = ssub.s32 1, %s6
  %s9 = scalar_select 0, %s8, %s6
  $region1: #{tpu_custom_call.1} parent=0
    #allocation2 [shape = 'u8[4096]{0}', space=vmem, size = 0x1000, scoped, tag = 'input window, operand 0, single buffered']
    #allocation3 [shape = 's32[1]{0}', space=sflag, size = 0x4, scoped, tag = 'scoped memory for tpu_custom_call.1']
    #allocation4 [shape = 's32[1]{0}', space=sflag, size = 0x4, scoped, tag = 'scoped memory for tpu_custom_call.1']
    #allocation5 [shape = 'u8[4096]{0}', space=vmem, size = 0x1000, scoped, tag = 'input window, operand 1, single buffered']
    #allocation6 [shape = 's32[1]{0}', space=sflag, size = 0x4, scoped, tag = 'scoped memory for tpu_custom_call.1']
    #allocation7 [shape = 'u8[32768]{0}', space=vmem, size = 0x8000, scoped, tag = 'input window, operand 3, single buffered']
    #allocation8 [shape = 'u8[4096]{0}', space=vmem, size = 0x1000, scoped, tag = 'output window, operand 0, single buffered']
    %10 = vsyncpa [#allocation3], 0
    %11 = vsyncpa [#allocation6], 0
    %12 = vsyncpa [#allocation4], 0
    // Predicated region
    $region2: #{tpu_custom_call.1} parent=1 // pred_check
      _
    $region3: #{tpu_custom_call.1} parent=1 // pred_check_branch
      %14 = sbr.rel (0) target = $region5
    $region4: #{tpu_custom_call.1} parent=1 // pred_region
      %16 = vsyncadd [#allocation3], 0
      %s18 = sshll.u32 %s0, 4
      %s19 = int_to_ptr.hbm [resolvable:$true] %s18
      %s20 = sshll.u32 [#allocation2], 4
      %s21 = int_to_ptr.vmem [resolvable:$true] %s20
      %23 = dma.hbm_to_vmem [thread:$0]  %s19, 128, %s21, [#allocation3]
    $region5: #{tpu_custom_call.1} parent=1 // pred_fallthru
      _
    // Predicated region
    $region6: #{tpu_custom_call.1} parent=1 // pred_check
      _
    $region7: #{tpu_custom_call.1} parent=1 // pred_check_branch
      %25 = sbr.rel (0) target = $region9
    $region8: #{tpu_custom_call.1} parent=1 // pred_region
      %27 = vsyncadd [#allocation6], 0
      %s29 = sshll.u32 %s1, 4
      %s30 = int_to_ptr.hbm [resolvable:$true] %s29
      %s31 = sshll.u32 [#allocation5], 4
      %s32 = int_to_ptr.vmem [resolvable:$true] %s31
      %34 = dma.hbm_to_vmem [thread:$0]  %s30, 128, %s32, [#allocation6]
    $region9: #{tpu_custom_call.1} parent=1 // pred_fallthru
      _
    // Predicated region
    $region10: #{tpu_custom_call.1} parent=1 // pred_check
      _
    $region11: #{tpu_custom_call.1} parent=1 // pred_check_branch
      %36 = sbr.rel (0) target = $region13
    $region12: #{tpu_custom_call.1} parent=1 // pred_region
      _
    $region13: #{tpu_custom_call.1} parent=1 // pred_fallthru
      _
    // Predicated region
    $region14: #{tpu_custom_call.1} parent=1 // pred_check
      _
    $region15: #{tpu_custom_call.1} parent=1 // pred_check_branch
      %38 = sbr.rel (0) target = $region17
    $region16: #{tpu_custom_call.1} parent=1 // pred_region
      %40 = vsyncadd [#allocation6], 0
      %s41 = sshll.u32 %s3, 4
      %s42 = int_to_ptr.hbm [resolvable:$true] %s41
      %s43 = sshll.u32 [#allocation7], 4
      %s44 = int_to_ptr.vmem [resolvable:$true] %s43
      %49 = dma.hbm_to_vmem [thread:$0]  %s42, 1024, %s44, [#allocation6], 128, 128, 8
    $region17: #{tpu_custom_call.1} parent=1 // pred_fallthru
      _
    // Predicated region
    $region18: #{tpu_custom_call.1} parent=1 // pred_check
      _
    $region19: #{tpu_custom_call.1} parent=1 // pred_check_branch
      %51 = sbr.rel (0) target = $region21
    $region20: #{tpu_custom_call.1} parent=1 // pred_region
      _
    $region21: #{tpu_custom_call.1} parent=1 // pred_fallthru
      _
    // Predicated region
    $region22: #{tpu_custom_call.1} parent=1 // pred_check
      _
    $region23: #{tpu_custom_call.1} parent=1 // pred_check_branch
      %53 = sbr.rel (0) target = $region25
    $region24: #{tpu_custom_call.1} parent=1 // pred_region
      %55 = dma.done [#allocation3], 128
    $region25: #{tpu_custom_call.1} parent=1 // pred_fallthru
      _
    // Predicated region
    $region26: #{tpu_custom_call.1} parent=1 // pred_check
      _
    $region27: #{tpu_custom_call.1} parent=1 // pred_check_branch
      %57 = sbr.rel (0) target = $region29
    $region28: #{tpu_custom_call.1} parent=1 // pred_region
      %59 = dma.done [#allocation6], 128
    $region29: #{tpu_custom_call.1} parent=1 // pred_fallthru
      _
    // Predicated region
    $region30: #{tpu_custom_call.1} parent=1 // pred_check
      _
    $region31: #{tpu_custom_call.1} parent=1 // pred_check_branch
      %61 = sbr.rel (0) target = $region33
    $region32: #{tpu_custom_call.1} parent=1 // pred_region
      %63 = dma.done [#allocation6], 1024
    $region33: #{tpu_custom_call.1} parent=1 // pred_fallthru
      _
    %v64 = vld [vmem:[#allocation2] sm:$0xff]
    %v65 = vld [vmem:[#allocation5] sm:$0x7f]
    %v66 = vld [vmem:[#allocation7] sm:$0xff]
    %v67 = vld [vmem:[#allocation7 + $0x8] sm:$0xff]
    %v68 = vld [vmem:[#allocation7 + $0x10] sm:$0xff]
    %v69 = vld [vmem:[#allocation7 + $0x18] sm:$0xff]
    %v70 = vld [vmem:[#allocation7 + $0x20] sm:$0xff]
    %v71 = vld [vmem:[#allocation7 + $0x28] sm:$0xff]
    %v72 = vld [vmem:[#allocation7 + $0x30] sm:$0xff]
    %v73 = vld [vmem:[#allocation7 + $0x38] sm:$0xff]
    %v74 = vld [vmem:[%s2] sm:$0x1]
    %v76 = vperm.slane %v74, 0
    %vm78 = vcmask 56320
    %v80 = vsel %vm78, %v64, 0
    %vm82 = vcmask 1046528
    %v84 = vsel %vm82, %v65, 0
    %86 = vmatpush.msra.mxu0 0.0
    %87 = vmatpush.msra.mxu0 0.0
    %88 = vmatpush.msra.mxu0 0.0
    %89 = vmatpush.msra.mxu0 0.0
    %90 = vmatpush.msra.mxu0 0.0
    %91 = vmatpush.msra.mxu0 0.0
    %92 = vmatpush.msra.mxu0 0.0
    %93 = vmatpush.msra.mxu0 0.0
    %94 = vmatpush.msra.mxu0 0.0
    %95 = vmatpush.msra.mxu0 0.0
    %96 = vmatpush.msra.mxu0 0.0
    %97 = vmatpush.msra.mxu0 0.0
    %98 = vmatpush.msra.mxu0 0.0
    %99 = vmatpush.msra.mxu0 0.0
    %100 = vmatpush.msra.mxu0 0.0
    %101 = vmatpush.msra.mxu0 %v84
    %102 = vmatmul.f32.gmra.mxu0 %v80
    %v103 = vpop.f32.mrf.mxu0
    %v104 = vadd.f32 %v76, %v103
    %105 = vdwg.mxu0
    %v106 = vmax.f32 %v104, 0.0
    %v107 = vld [vmem:[%s4] sm:$0x1]
    %v109 = vperm.slane %v107, 0
    %vm111 = vcmask 523264
    %v113 = vsel %vm111, %v106, 0
    %115 = vmatpush.msra.mxu0 0.0
    %116 = vmatpush.msra.mxu0 0.0
    %117 = vmatpush.msra.mxu0 0.0
    %118 = vmatpush.msra.mxu0 0.0
    %119 = vmatpush.msra.mxu0 0.0
    %120 = vmatpush.msra.mxu0 0.0
    %121 = vmatpush.msra.mxu0 0.0
    %122 = vmatpush.msra.mxu0 0.0
    %123 = vmatpush.msra.mxu0 %v73
    %124 = vmatpush.msra.mxu0 %v72
    %125 = vmatpush.msra.mxu0 %v71
    %126 = vmatpush.msra.mxu0 %v70
    %127 = vmatpush.msra.mxu0 %v69
    %128 = vmatpush.msra.mxu0 %v68
    %129 = vmatpush.msra.mxu0 %v67
    %130 = vmatpush.msra.mxu0 %v66
    %131 = vmatmul.f32.gmra.mxu0 %v113
    %v132 = vpop.f32.mrf.mxu0
    %v133 = vadd.f32 %v109, %v132
    %134 = vdwg.mxu0
    %135 = vst [vmem:[#allocation8] sm:$0xff] %v133
    // Predicated region
    $region34: #{tpu_custom_call.1} parent=1 // pred_check
      _
    $region35: #{tpu_custom_call.1} parent=1 // pred_check_branch
      %137 = sbr.rel (0) target = $region37
    $region36: #{tpu_custom_call.1} parent=1 // pred_region
      %139 = vsyncadd [#allocation4], 0
      %s141 = sshll.u32 [#allocation8], 4
      %s142 = int_to_ptr.vmem [resolvable:$true] %s141
      %s143 = sshll.u32 %s5, 4
      %s144 = int_to_ptr.hbm [resolvable:$true] %s143
      %146 = dma.vmem_to_hbm [thread:$0]  %s142, 128, %s144, [#allocation4]
    $region37: #{tpu_custom_call.1} parent=1 // pred_fallthru
      _
    // Predicated region
    $region38: #{tpu_custom_call.1} parent=1 // pred_check
      _
    $region39: #{tpu_custom_call.1} parent=1 // pred_check_branch
      %148 = sbr.rel (0) target = $region41
    $region40: #{tpu_custom_call.1} parent=1 // pred_region
      %150 = dma.done [#allocation4], 128
    $region41: #{tpu_custom_call.1} parent=1 // pred_fallthru
      _
    %151 = vsyncpa [#allocation3], 1
    %152 = vsyncpa [#allocation6], 1
    %153 = vsyncpa [#allocation4], 1

</llo_original>
